<compile_context>
chip_gen: v5e
topology: v5e:2x2
jax: 0.10.0
libtpu: 0.0.40
codegen_flags: <defaults>
</compile_context>

<pallas_src>
import functools

import jax
import jax.numpy as jnp
from jax.experimental import pallas as pl
from jax.experimental.pallas import tpu as pltpu


LANE = 128


def _round_up(x, m):
    return (x + m - 1) // m * m


def _pick_tm(m, tm_req):
    """Largest row tile <= tm_req that divides M and is a multiple of 8."""
    tm_req = max(8, min(tm_req, m))
    for t in range(tm_req, 7, -1):
        if m % t == 0 and t % 8 == 0:
            return t
    return m  # full-extent block is always a legal block shape


# ------------------------------- Pallas kernel ------------------------------ #

def _fused_conv_bn_relu_kernel(a_ref, w_ref, gamma_ref, beta_ref, o_ref, *,
                               m_total, eps, bn, relu):
    """grid = (M // tm,), sequential ("arbitrary").

    Each step: one (tm, K_pad) x (K_pad, C_pad) MXU matmul stored into the
    output block (resident in VMEM for the whole grid).  On the last step,
    BatchNorm batch statistics are computed over the full resident (M, C_pad)
    tensor (sums on the MXU, two-pass variance) and the affine + ReLU epilogue
    is applied in place before the single HBM writeback.
    """
    i = pl.program_id(0)
    tm = a_ref.shape[0]

    # ---- conv tile on the MXU (f32 accumulate even for bf16 inputs) ----
    y = jnp.dot(a_ref[...], w_ref[...], preferred_element_type=jnp.float32)
    row = pl.multiple_of(i * tm, tm)
    o_ref[pl.ds(row, tm), :] = y

    if bn or relu:
        @pl.when(i == pl.num_programs(0) - 1)
        def _():
            yf = o_ref[...]                     # (M, C_pad), resident in VMEM
            if bn:
                inv_m = 1.0 / float(m_total)
                ones = jnp.ones((1, yf.shape[0]), jnp.float32)
                # Column (per-channel) reductions on the MXU, not the XLU.
                mean = jnp.dot(ones, yf,
                               preferred_element_type=jnp.float32) * inv_m
                cen = yf - mean
                var = jnp.dot(ones, cen * cen,
                              preferred_element_type=jnp.float32) * inv_m
                scale = gamma_ref[...] * jax.lax.rsqrt(var + eps)
                shift = beta_ref[...] - mean * scale
                yf = yf * scale + shift
            if relu:
                yf = jnp.maximum(yf, 0.0)
            o_ref[...] = yf


# ------------------------------ wrapper / glue ------------------------------ #

def _im2col(x_nhwc, kh, kw, stride, padding, dilation):
    N, H, W, Cin = x_nhwc.shape
    xp = jnp.pad(x_nhwc, ((0, 0), (padding, padding), (padding, padding), (0, 0)))
    OH = (H + 2 * padding - dilation * (kh - 1) - 1) // stride + 1
    OW = (W + 2 * padding - dilation * (kw - 1) - 1) // stride + 1
    cols = []
    for i in range(kh):
        for j in range(kw):
            cols.append(
                xp[:,
                   i * dilation: i * dilation + (OH - 1) * stride + 1: stride,
                   j * dilation: j * dilation + (OW - 1) * stride + 1: stride,
                   :])
    patches = jnp.concatenate(cols, axis=-1)        # (N, OH, OW, KH*KW*Cin)
    return patches.reshape(N * OH * OW, kh * kw * Cin), OH, OW


def basic_conv_rfb_forward(x_nchw, weight, gamma, beta, *, stride=1, padding=0,
                           dilation=1, groups=1, relu=True, bn=True, eps=1e-5,
                           tm=512, compute_dtype=jnp.float32):
    assert groups == 1, "only groups=1 supported"
    N, Cin, H, W = x_nchw.shape
    Cout, _, KH, KW = weight.shape

    x_nhwc = jnp.transpose(x_nchw, (0, 2, 3, 1)).astype(jnp.float32)
    patches, OH, OW = _im2col(x_nhwc, KH, KW, stride, padding, dilation)
    M, K = patches.shape

    # Lane-dense padding of the contraction and output-channel dims.
    K_pad = _round_up(K, LANE)
    C_pad = _round_up(Cout, LANE)
    tm = _pick_tm(M, tm)

    a = jnp.pad(patches, ((0, 0), (0, K_pad - K))).astype(compute_dtype)
    # PyTorch weight (Cout, Cin, KH, KW) -> (KH, KW, Cin, Cout), match patches.
    w2d = jnp.transpose(weight, (2, 3, 1, 0)).reshape(K, Cout).astype(jnp.float32)
    w2d = jnp.pad(w2d, ((0, K_pad - K), (0, C_pad - Cout))).astype(compute_dtype)
    g = jnp.pad(gamma.astype(jnp.float32).reshape(1, Cout),
                ((0, 0), (0, C_pad - Cout)))
    b = jnp.pad(beta.astype(jnp.float32).reshape(1, Cout),
                ((0, 0), (0, C_pad - Cout)))

    itm = jnp.dtype(compute_dtype).itemsize
    # Double-buffered A/W inputs + resident f32 output block (+ slack).
    vmem_bytes = (2 * tm * K_pad * itm + 2 * K_pad * C_pad * itm
                  + 4 * C_pad * 4 + 2 * M * C_pad * 4) + (2 << 20)
    vmem_bytes = min(int(vmem_bytes), 48 << 20)

    kernel = functools.partial(_fused_conv_bn_relu_kernel,
                               m_total=M, eps=float(eps), bn=bn, relu=relu)

    out_full = pl.pallas_call(
        kernel,
        out_shape=jax.ShapeDtypeStruct((M, C_pad), jnp.float32),
        grid_spec=pltpu.PrefetchScalarGridSpec(
            num_scalar_prefetch=0,
            grid=(M // tm,),
            in_specs=[
                pl.BlockSpec((tm, K_pad), lambda i: (i, 0)),
                pl.BlockSpec((K_pad, C_pad), lambda i: (0, 0)),
                pl.BlockSpec((1, C_pad), lambda i: (0, 0)),
                pl.BlockSpec((1, C_pad), lambda i: (0, 0)),
            ],
            # Constant index_map -> output stays resident in VMEM across the
            # sequential grid; one HBM writeback at the end.
            out_specs=pl.BlockSpec((M, C_pad), lambda i: (0, 0)),
        ),
        compiler_params=pltpu.CompilerParams(
            dimension_semantics=("arbitrary",),
            vmem_limit_bytes=vmem_bytes),
    )(a, w2d, g, b)

    out = out_full[:, :Cout].reshape(N, OH, OW, Cout)
    return jnp.transpose(out, (0, 3, 1, 2))          # back to NCHW


# --------------------------------- reference -------------------------------- #

def _reference(x, w, gamma, beta, stride, padding, dilation, eps):
    y = jax.lax.conv_general_dilated(
        x, w, window_strides=(stride, stride),
        padding=[(padding, padding), (padding, padding)],
        rhs_dilation=(dilation, dilation),
        dimension_numbers=("NCHW", "OIHW", "NCHW"))
    # nn.BatchNorm2d training mode: batch mean / biased batch variance.
    mean = jnp.mean(y, axis=(0, 2, 3), keepdims=True)
    var = jnp.mean((y - mean) ** 2, axis=(0, 2, 3), keepdims=True)
    y = (y - mean) / jnp.sqrt(var + eps)
    y = y * gamma.reshape(1, -1, 1, 1) + beta.reshape(1, -1, 1, 1)
    return jnp.maximum(y, 0.0)


# ----------------------------------- main ------------------------------------ #

if __name__ == "__main__":
    # BasicConvRFB(in_planes=4, out_planes=8, kernel_size=3, stride=1, padding=1)
    in_planes, out_planes, ksize, stride, padding, dilation = 4, 8, 3, 1, 1, 1
    eps = 1e-5

    key = jax.random.PRNGKey(0)
    kx, kw, kg, kb = jax.random.split(key, 4)
    x = jax.random.normal(kx, (2, in_planes, 16, 16), dtype=jnp.float32)
    weight = 0.1 * jax.random.normal(
        kw, (out_planes, in_planes, ksize, ksize), dtype=jnp.float32)
    gamma = 1.0 + 0.05 * jax.random.normal(kg, (out_planes,), dtype=jnp.float32)
    beta = 0.05 * jax.random.normal(kb, (out_planes,), dtype=jnp.float32)

    ref = _reference(x, weight, gamma, beta, stride, padding, dilation, eps)

    # f32 compute path: tight-tolerance check against the f32 reference.
    out = basic_conv_rfb_forward(
        x, weight, gamma, beta,
        stride=stride, padding=padding, dilation=dilation,
        groups=1, relu=True, bn=True, eps=eps, compute_dtype=jnp.float32)
    out = jax.block_until_ready(out)
    assert out.shape == ref.shape == (2, out_planes, 16, 16)
    assert jnp.allclose(out, ref, rtol=1e-4, atol=1e-4), (
        float(jnp.max(jnp.abs(out - ref))))

    # bf16 compute path (halves A/W HBM traffic on v6e/v7x, f32 accumulation).
    # Looser tolerance: inputs rounded to bf16 give ~1e-2-level post-BN error.
    out_bf16 = basic_conv_rfb_forward(
        x, weight, gamma, beta,
        stride=stride, padding=padding, dilation=dilation,
        groups=1, relu=True, bn=True, eps=eps, compute_dtype=jnp.bfloat16)
    out_bf16 = jax.block_until_ready(out_bf16)
    assert jnp.allclose(out_bf16, ref, rtol=3e-2, atol=3e-2), (
        float(jnp.max(jnp.abs(out_bf16 - ref))))

    print("KERNEL_OK")
</pallas_src>

<mosaic_0001>
module attributes {stable_mosaic.version = 11 : i64} {
  func.func @_fused_conv_bn_relu_kernel(%arg0: i32, %arg1: memref<512x128xf32, #tpu.memory_space<vmem>>, %arg2: memref<128x128xf32, #tpu.memory_space<vmem>>, %arg3: memref<1x128xf32, #tpu.memory_space<vmem>>, %arg4: memref<1x128xf32, #tpu.memory_space<vmem>>, %arg5: memref<512x128xf32, #tpu.memory_space<vmem>>) attributes {dimension_semantics = [#tpu.dimension_semantics<arbitrary>], iteration_bounds = array<i64: 1>, scalar_prefetch = 0 : i64, scratch_operands = 0 : i64, tpu.core_type = #tpu.core_type<tc>, window_params = [{transform_indices = @transform_0, window_bounds = array<i64: 512, 128>}, {pipeline_mode = #tpu.pipeline_mode<synchronous>, transform_indices = @transform_1, window_bounds = array<i64: 128, 128>}, {pipeline_mode = #tpu.pipeline_mode<synchronous>, transform_indices = @transform_2, window_bounds = array<i64: 1, 128>}, {pipeline_mode = #tpu.pipeline_mode<synchronous>, transform_indices = @transform_3, window_bounds = array<i64: 1, 128>}, {pipeline_mode = #tpu.pipeline_mode<synchronous>, transform_indices = @transform_4, window_bounds = array<i64: 512, 128>}]} {
    %c0 = arith.constant 0 : index
    %c0_0 = arith.constant 0 : index
    %0 = vector.load %arg1[%c0, %c0_0] : memref<512x128xf32, #tpu.memory_space<vmem>>, vector<512x128xf32>
    %c0_1 = arith.constant 0 : index
    %c0_2 = arith.constant 0 : index
    %1 = vector.load %arg2[%c0_1, %c0_2] : memref<128x128xf32, #tpu.memory_space<vmem>>, vector<128x128xf32>
    %cst = arith.constant dense<0.000000e+00> : vector<512x128xf32>
    %2 = tpu.matmul %0, %1, %cst {dimension_numbers = #tpu.dot_dimension_numbers<[1], [0], [0], [1], [0, 0, 1, 1], [], []>} : vector<512x128xf32>, vector<128x128xf32>, vector<512x128xf32> -> vector<512x128xf32>
    %c512_i32 = arith.constant 512 : i32
    %3 = arith.muli %arg0, %c512_i32 : i32
    %4 = tpu.assume_multiple %3, 512 : i32
    %5 = arith.index_cast %4 : i32 to index
    %c0_3 = arith.constant 0 : index
    %6 = vector.load %arg5[%5, %c0_3] : memref<512x128xf32, #tpu.memory_space<vmem>>, vector<512x128xf32>
    tpu.vector_store %arg5[%5, %c0_3], %2 {strides = array<i32>} : memref<512x128xf32, #tpu.memory_space<vmem>>, vector<512x128xf32>,
    %c0_i32 = arith.constant 0 : i32
    %7 = arith.cmpi eq, %arg0, %c0_i32 : i32
    %8 = arith.extui %7 : i1 to i32
    %c0_i32_4 = arith.constant 0 : i32
    %9 = arith.cmpi ne, %8, %c0_i32_4 : i32
    scf.if %9 {
      %c0_5 = arith.constant 0 : index
      %c0_6 = arith.constant 0 : index
      %10 = vector.load %arg5[%c0_5, %c0_6] : memref<512x128xf32, #tpu.memory_space<vmem>>, vector<512x128xf32>
      %cst_7 = arith.constant 1.000000e+00 : f32
      %11 = vector.broadcast %cst_7 : f32 to vector<1x512xf32>
      %cst_8 = arith.constant dense<0.000000e+00> : vector<1x128xf32>
      %12 = tpu.matmul %11, %10, %cst_8 {dimension_numbers = #tpu.dot_dimension_numbers<[1], [0], [0], [1], [0, 0, 1, 1], [], []>} : vector<1x512xf32>, vector<512x128xf32>, vector<1x128xf32> -> vector<1x128xf32>
      %cst_9 = arith.constant 0.001953125 : f32
      %13 = vector.broadcast %cst_9 : f32 to vector<1x128xf32>
      %14 = arith.mulf %12, %13 : vector<1x128xf32>
      %15 = vector.broadcast %14 : vector<1x128xf32> to vector<512x128xf32>
      %16 = arith.subf %10, %15 : vector<512x128xf32>
      %17 = arith.mulf %16, %16 : vector<512x128xf32>
      %cst_10 = arith.constant dense<0.000000e+00> : vector<1x128xf32>
      %18 = tpu.matmul %11, %17, %cst_10 {dimension_numbers = #tpu.dot_dimension_numbers<[1], [0], [0], [1], [0, 0, 1, 1], [], []>} : vector<1x512xf32>, vector<512x128xf32>, vector<1x128xf32> -> vector<1x128xf32>
      %cst_11 = arith.constant 0.001953125 : f32
      %19 = vector.broadcast %cst_11 : f32 to vector<1x128xf32>
      %20 = arith.mulf %18, %19 : vector<1x128xf32>
      %c0_12 = arith.constant 0 : index
      %c0_13 = arith.constant 0 : index
      %21 = vector.load %arg3[%c0_12, %c0_13] : memref<1x128xf32, #tpu.memory_space<vmem>>, vector<1x128xf32>
      %cst_14 = arith.constant 9.99999974E-6 : f32
      %22 = vector.broadcast %cst_14 : f32 to vector<1x128xf32>
      %23 = arith.addf %20, %22 : vector<1x128xf32>
      %24 = math.rsqrt %23 : vector<1x128xf32>
      %25 = arith.mulf %21, %24 : vector<1x128xf32>
      %c0_15 = arith.constant 0 : index
      %c0_16 = arith.constant 0 : index
      %26 = vector.load %arg4[%c0_15, %c0_16] : memref<1x128xf32, #tpu.memory_space<vmem>>, vector<1x128xf32>
      %27 = arith.mulf %14, %25 : vector<1x128xf32>
      %28 = arith.subf %26, %27 : vector<1x128xf32>
      %29 = vector.broadcast %25 : vector<1x128xf32> to vector<512x128xf32>
      %30 = arith.mulf %10, %29 : vector<512x128xf32>
      %31 = vector.broadcast %28 : vector<1x128xf32> to vector<512x128xf32>
      %32 = arith.addf %30, %31 : vector<512x128xf32>
      %cst_17 = arith.constant 0.000000e+00 : f32
      %33 = vector.broadcast %cst_17 : f32 to vector<512x128xf32>
      %34 = arith.maximumf %32, %33 : vector<512x128xf32>
      %c0_18 = arith.constant 0 : index
      %c0_19 = arith.constant 0 : index
      %35 = vector.load %arg5[%c0_18, %c0_19] : memref<512x128xf32, #tpu.memory_space<vmem>>, vector<512x128xf32>
      tpu.vector_store %arg5[%c0_18, %c0_19], %34 {strides = array<i32>} : memref<512x128xf32, #tpu.memory_space<vmem>>, vector<512x128xf32>,
    } else {
    }
    return
  }
  func.func @transform_0(%arg0: i32) -> (i32, i32) {
    %c0_i32 = arith.constant 0 : i32
    %c0_i32_0 = arith.constant 0 : i32
    return %arg0, %c0_i32 : i32, i32
  }
  func.func @transform_1(%arg0: i32) -> (i32, i32) {
    %c0_i32 = arith.constant 0 : i32
    %c0_i32_0 = arith.constant 0 : i32
    %c0_i32_1 = arith.constant 0 : i32
    return %c0_i32, %c0_i32_0 : i32, i32
  }
  func.func @transform_2(%arg0: i32) -> (i32, i32) {
    %c0_i32 = arith.constant 0 : i32
    %c0_i32_0 = arith.constant 0 : i32
    %c0_i32_1 = arith.constant 0 : i32
    return %c0_i32, %c0_i32_0 : i32, i32
  }
  func.func @transform_3(%arg0: i32) -> (i32, i32) {
    %c0_i32 = arith.constant 0 : i32
    %c0_i32_0 = arith.constant 0 : i32
    %c0_i32_1 = arith.constant 0 : i32
    return %c0_i32, %c0_i32_0 : i32, i32
  }
  func.func @transform_4(%arg0: i32) -> (i32, i32) {
    %c0_i32 = arith.constant 0 : i32
    %c0_i32_0 = arith.constant 0 : i32
    %c0_i32_1 = arith.constant 0 : i32
    return %c0_i32, %c0_i32_0 : i32, i32
  }
}

</mosaic_0001>

<llo_original>
// kernel: tpu_custom_call.1
$region0: #{tpu_custom_call.1}
  #allocation0 [shape = 'u32[]', space=smem, size = 0x4, offset = 0x4, fixed_abs, tag = 'smem constant byte address 0x4 - core index']
  #allocation1 [shape = 'u32[72,128]{1,0:T(1,128)}', space=vmem, size = 0x9000, scoped, tag = 'internal scratch']
  %s0 = inlined_call_operand.hbm [shape: f32[512,128], index: 0, kind: input, shape index: {}]
  %s1 = inlined_call_operand.hbm [shape: f32[128,128], index: 1, kind: input, shape index: {}]
  %s2 = inlined_call_operand.vmem [shape: f32[1,128], index: 2, kind: input, shape index: {}]
  %s3 = inlined_call_operand.vmem [shape: f32[1,128], index: 3, kind: input, shape index: {}]
  %s4 = inlined_call_operand.hbm [shape: f32[512,128], index: 4, kind: output, shape index: {}]
  %s5 = sld [smem:[#allocation0]]
  $region38: #{tpu_custom_call.1} parent=0
    _
  %s7 = ssub.s32 1, %s5
  %s8 = scalar_select 0, %s7, %s5
  $region1: #{tpu_custom_call.1} parent=0
    #allocation2 [shape = 'u8[262144]{0}', space=vmem, size = 0x40000, scoped, tag = 'input window, operand 0, single buffered']
    #allocation3 [shape = 's32[1]{0}', space=sflag, size = 0x4, scoped, tag = 'scoped memory for tpu_custom_call.1']
    #allocation4 [shape = 's32[1]{0}', space=sflag, size = 0x4, scoped, tag = 'scoped memory for tpu_custom_call.1']
    #allocation5 [shape = 'u8[65536]{0}', space=vmem, size = 0x10000, scoped, tag = 'input window, operand 1, single buffered']
    #allocation6 [shape = 's32[1]{0}', space=sflag, size = 0x4, scoped, tag = 'scoped memory for tpu_custom_call.1']
    #allocation7 [shape = 'u8[262144]{0}', space=vmem, size = 0x40000, scoped, tag = 'output window, operand 0, single buffered']
    %9 = vsyncpa [#allocation3], 0
    %10 = vsyncpa [#allocation6], 0
    %11 = vsyncpa [#allocation4], 0
    // Predicated region
    $region2: #{tpu_custom_call.1} parent=1 // pred_check
      _
    $region3: #{tpu_custom_call.1} parent=1 // pred_check_branch
      %13 = sbr.rel (0) target = $region5
    $region4: #{tpu_custom_call.1} parent=1 // pred_region
      %15 = vsyncadd [#allocation3], 0
      %s16 = sshll.u32 %s0, 4
      %s17 = int_to_ptr.hbm [resolvable:$true] %s16
      %s18 = sshll.u32 [#allocation2], 4
      %s19 = int_to_ptr.vmem [resolvable:$true] %s18
      %24 = dma.hbm_to_vmem [thread:$0]  %s17, 8192, %s19, [#allocation3], 128, 128, 8
    $region5: #{tpu_custom_call.1} parent=1 // pred_fallthru
      _
    // Predicated region
    $region6: #{tpu_custom_call.1} parent=1 // pred_check
      _
    $region7: #{tpu_custom_call.1} parent=1 // pred_check_branch
      %26 = sbr.rel (0) target = $region9
    $region8: #{tpu_custom_call.1} parent=1 // pred_region
      %28 = vsyncadd [#allocation6], 0
      %s29 = sshll.u32 %s1, 4
      %s30 = int_to_ptr.hbm [resolvable:$true] %s29
      %s31 = sshll.u32 [#allocation5], 4
      %s32 = int_to_ptr.vmem [resolvable:$true] %s31
      %37 = dma.hbm_to_vmem [thread:$0]  %s30, 2048, %s32, [#allocation6], 128, 128, 8
    $region9: #{tpu_custom_call.1} parent=1 // pred_fallthru
      _
    // Predicated region
    $region10: #{tpu_custom_call.1} parent=1 // pred_check
      _
    $region11: #{tpu_custom_call.1} parent=1 // pred_check_branch
      %39 = sbr.rel (0) target = $region13
    $region12: #{tpu_custom_call.1} parent=1 // pred_region
      _
    $region13: #{tpu_custom_call.1} parent=1 // pred_fallthru
      _
    // Predicated region
    $region14: #{tpu_custom_call.1} parent=1 // pred_check
      _
    $region15: #{tpu_custom_call.1} parent=1 // pred_check_branch
      %41 = sbr.rel (0) target = $region17
    $region16: #{tpu_custom_call.1} parent=1 // pred_region
      _
    $region17: #{tpu_custom_call.1} parent=1 // pred_fallthru
      _
    // Predicated region
    $region18: #{tpu_custom_call.1} parent=1 // pred_check
      _
    $region19: #{tpu_custom_call.1} parent=1 // pred_check_branch
      %43 = sbr.rel (0) target = $region21
    $region20: #{tpu_custom_call.1} parent=1 // pred_region
      %45 = dma.done [#allocation3], 8192
    $region21: #{tpu_custom_call.1} parent=1 // pred_fallthru
      _
    // Predicated region
    $region22: #{tpu_custom_call.1} parent=1 // pred_check
      _
    $region23: #{tpu_custom_call.1} parent=1 // pred_check_branch
      %47 = sbr.rel (0) target = $region25
    $region24: #{tpu_custom_call.1} parent=1 // pred_region
      %49 = dma.done [#allocation6], 2048
    $region25: #{tpu_custom_call.1} parent=1 // pred_fallthru
      _
    %v50 = vld [vmem:[#allocation2] sm:$0xff]
    %v51 = vld [vmem:[#allocation2 + $0x8] sm:$0xff]
    %v52 = vld [vmem:[#allocation2 + $0x10] sm:$0xff]
    %v53 = vld [vmem:[#allocation2 + $0x18] sm:$0xff]
    %v54 = vld [vmem:[#allocation2 + $0x20] sm:$0xff]
    %v55 = vld [vmem:[#allocation2 + $0x28] sm:$0xff]
    %v56 = vld [vmem:[#allocation2 + $0x30] sm:$0xff]
    %v57 = vld [vmem:[#allocation2 + $0x38] sm:$0xff]
    %v58 = vld [vmem:[#allocation2 + $0x40] sm:$0xff]
    %v59 = vld [vmem:[#allocation2 + $0x48] sm:$0xff]
    %v60 = vld [vmem:[#allocation2 + $0x50] sm:$0xff]
    %v61 = vld [vmem:[#allocation2 + $0x58] sm:$0xff]
    %v62 = vld [vmem:[#allocation2 + $0x60] sm:$0xff]
    %v63 = vld [vmem:[#allocation2 + $0x68] sm:$0xff]
    %v64 = vld [vmem:[#allocation2 + $0x70] sm:$0xff]
    %v65 = vld [vmem:[#allocation2 + $0x78] sm:$0xff]
    %v66 = vld [vmem:[#allocation2 + $0x80] sm:$0xff]
    %v67 = vld [vmem:[#allocation2 + $0x88] sm:$0xff]
    %v68 = vld [vmem:[#allocation2 + $0x90] sm:$0xff]
    %v69 = vld [vmem:[#allocation2 + $0x98] sm:$0xff]
    %v70 = vld [vmem:[#allocation2 + $0xa0] sm:$0xff]
    %v71 = vld [vmem:[#allocation2 + $0xa8] sm:$0xff]
    %v72 = vld [vmem:[#allocation2 + $0xb0] sm:$0xff]
    %v73 = vld [vmem:[#allocation2 + $0xb8] sm:$0xff]
    %v74 = vld [vmem:[#allocation2 + $0xc0] sm:$0xff]
    %v75 = vld [vmem:[#allocation2 + $0xc8] sm:$0xff]
    %v76 = vld [vmem:[#allocation2 + $0xd0] sm:$0xff]
    %v77 = vld [vmem:[#allocation2 + $0xd8] sm:$0xff]
    %v78 = vld [vmem:[#allocation2 + $0xe0] sm:$0xff]
    %v79 = vld [vmem:[#allocation2 + $0xe8] sm:$0xff]
    %v80 = vld [vmem:[#allocation2 + $0xf0] sm:$0xff]
    %v81 = vld [vmem:[#allocation2 + $0xf8] sm:$0xff]
    %v82 = vld [vmem:[#allocation2 + $0x100] sm:$0xff]
    %v83 = vld [vmem:[#allocation2 + $0x108] sm:$0xff]
    %v84 = vld [vmem:[#allocation2 + $0x110] sm:$0xff]
    %v85 = vld [vmem:[#allocation2 + $0x118] sm:$0xff]
    %v86 = vld [vmem:[#allocation2 + $0x120] sm:$0xff]
    %v87 = vld [vmem:[#allocation2 + $0x128] sm:$0xff]
    %v88 = vld [vmem:[#allocation2 + $0x130] sm:$0xff]
    %v89 = vld [vmem:[#allocation2 + $0x138] sm:$0xff]
    %v90 = vld [vmem:[#allocation2 + $0x140] sm:$0xff]
    %v91 = vld [vmem:[#allocation2 + $0x148] sm:$0xff]
    %v92 = vld [vmem:[#allocation2 + $0x150] sm:$0xff]
    %v93 = vld [vmem:[#allocation2 + $0x158] sm:$0xff]
    %v94 = vld [vmem:[#allocation2 + $0x160] sm:$0xff]
    %v95 = vld [vmem:[#allocation2 + $0x168] sm:$0xff]
    %v96 = vld [vmem:[#allocation2 + $0x170] sm:$0xff]
    %v97 = vld [vmem:[#allocation2 + $0x178] sm:$0xff]
    %v98 = vld [vmem:[#allocation2 + $0x180] sm:$0xff]
    %v99 = vld [vmem:[#allocation2 + $0x188] sm:$0xff]
    %v100 = vld [vmem:[#allocation2 + $0x190] sm:$0xff]
    %v101 = vld [vmem:[#allocation2 + $0x198] sm:$0xff]
    %v102 = vld [vmem:[#allocation2 + $0x1a0] sm:$0xff]
    %v103 = vld [vmem:[#allocation2 + $0x1a8] sm:$0xff]
    %v104 = vld [vmem:[#allocation2 + $0x1b0] sm:$0xff]
    %v105 = vld [vmem:[#allocation2 + $0x1b8] sm:$0xff]
    %v106 = vld [vmem:[#allocation2 + $0x1c0] sm:$0xff]
    %v107 = vld [vmem:[#allocation2 + $0x1c8] sm:$0xff]
    %v108 = vld [vmem:[#allocation2 + $0x1d0] sm:$0xff]
    %v109 = vld [vmem:[#allocation2 + $0x1d8] sm:$0xff]
    %v110 = vld [vmem:[#allocation2 + $0x1e0] sm:$0xff]
    %v111 = vld [vmem:[#allocation2 + $0x1e8] sm:$0xff]
    %v112 = vld [vmem:[#allocation2 + $0x1f0] sm:$0xff]
    %v113 = vld [vmem:[#allocation2 + $0x1f8] sm:$0xff]
    %v114 = vld [vmem:[#allocation5] sm:$0xff]
    %v115 = vld [vmem:[#allocation5 + $0x8] sm:$0xff]
    %v116 = vld [vmem:[#allocation5 + $0x10] sm:$0xff]
    %v117 = vld [vmem:[#allocation5 + $0x18] sm:$0xff]
    %v118 = vld [vmem:[#allocation5 + $0x20] sm:$0xff]
    %v119 = vld [vmem:[#allocation5 + $0x28] sm:$0xff]
    %v120 = vld [vmem:[#allocation5 + $0x30] sm:$0xff]
    %v121 = vld [vmem:[#allocation5 + $0x38] sm:$0xff]
    %v122 = vld [vmem:[#allocation5 + $0x40] sm:$0xff]
    %v123 = vld [vmem:[#allocation5 + $0x48] sm:$0xff]
    %v124 = vld [vmem:[#allocation5 + $0x50] sm:$0xff]
    %v125 = vld [vmem:[#allocation5 + $0x58] sm:$0xff]
    %v126 = vld [vmem:[#allocation5 + $0x60] sm:$0xff]
    %v127 = vld [vmem:[#allocation5 + $0x68] sm:$0xff]
    %v128 = vld [vmem:[#allocation5 + $0x70] sm:$0xff]
    %v129 = vld [vmem:[#allocation5 + $0x78] sm:$0xff]
    %130 = vmatpush.msra.mxu0 %v129
    %131 = vmatpush.msra.mxu0 %v128
    %132 = vmatpush.msra.mxu0 %v127
    %133 = vmatpush.msra.mxu0 %v126
    %134 = vmatpush.msra.mxu0 %v125
    %135 = vmatpush.msra.mxu0 %v124
    %136 = vmatpush.msra.mxu0 %v123
    %137 = vmatpush.msra.mxu0 %v122
    %138 = vmatpush.msra.mxu0 %v121
    %139 = vmatpush.msra.mxu0 %v120
    %140 = vmatpush.msra.mxu0 %v119
    %141 = vmatpush.msra.mxu0 %v118
    %142 = vmatpush.msra.mxu0 %v117
    %143 = vmatpush.msra.mxu0 %v116
    %144 = vmatpush.msra.mxu0 %v115
    %145 = vmatpush.msra.mxu0 %v114
    %146 = vmatmul.f32.gmra.mxu0 %v50
    %v147 = vpop.f32.mrf.mxu0
    %v148 = vadd.f32 0.0, %v147
    %149 = vmatmul.f32.gmra.mxu0 %v51
    %v150 = vpop.f32.mrf.mxu0
    %v151 = vadd.f32 0.0, %v150
    %152 = vmatmul.f32.gmra.mxu0 %v52
    %v153 = vpop.f32.mrf.mxu0
    %v154 = vadd.f32 0.0, %v153
    %155 = vmatmul.f32.gmra.mxu0 %v53
    %v156 = vpop.f32.mrf.mxu0
    %v157 = vadd.f32 0.0, %v156
    %158 = vmatmul.f32.gmra.mxu0 %v54
    %v159 = vpop.f32.mrf.mxu0
    %v160 = vadd.f32 0.0, %v159
    %161 = vmatmul.f32.gmra.mxu0 %v55
    %v162 = vpop.f32.mrf.mxu0
    %v163 = vadd.f32 0.0, %v162
    %164 = vmatmul.f32.gmra.mxu0 %v56
    %v165 = vpop.f32.mrf.mxu0
    %v166 = vadd.f32 0.0, %v165
    %167 = vmatmul.f32.gmra.mxu0 %v57
    %v168 = vpop.f32.mrf.mxu0
    %v169 = vadd.f32 0.0, %v168
    %170 = vmatmul.f32.gmra.mxu0 %v58
    %v171 = vpop.f32.mrf.mxu0
    %v172 = vadd.f32 0.0, %v171
    %173 = vmatmul.f32.gmra.mxu0 %v59
    %v174 = vpop.f32.mrf.mxu0
    %v175 = vadd.f32 0.0, %v174
    %176 = vmatmul.f32.gmra.mxu0 %v60
    %v177 = vpop.f32.mrf.mxu0
    %v178 = vadd.f32 0.0, %v177
    %179 = vmatmul.f32.gmra.mxu0 %v61
    %v180 = vpop.f32.mrf.mxu0
    %v181 = vadd.f32 0.0, %v180
    %182 = vmatmul.f32.gmra.mxu0 %v62
    %v183 = vpop.f32.mrf.mxu0
    %v184 = vadd.f32 0.0, %v183
    %185 = vmatmul.f32.gmra.mxu0 %v63
    %v186 = vpop.f32.mrf.mxu0
    %v187 = vadd.f32 0.0, %v186
    %188 = vmatmul.f32.gmra.mxu0 %v64
    %v189 = vpop.f32.mrf.mxu0
    %v190 = vadd.f32 0.0, %v189
    %191 = vmatmul.f32.gmra.mxu0 %v65
    %v192 = vpop.f32.mrf.mxu0
    %v193 = vadd.f32 0.0, %v192
    %194 = vmatmul.f32.gmra.mxu0 %v66
    %v195 = vpop.f32.mrf.mxu0
    %v196 = vadd.f32 0.0, %v195
    %197 = vmatmul.f32.gmra.mxu0 %v67
    %v198 = vpop.f32.mrf.mxu0
    %v199 = vadd.f32 0.0, %v198
    %200 = vmatmul.f32.gmra.mxu0 %v68
    %v201 = vpop.f32.mrf.mxu0
    %v202 = vadd.f32 0.0, %v201
    %203 = vmatmul.f32.gmra.mxu0 %v69
    %v204 = vpop.f32.mrf.mxu0
    %v205 = vadd.f32 0.0, %v204
    %206 = vmatmul.f32.gmra.mxu0 %v70
    %v207 = vpop.f32.mrf.mxu0
    %v208 = vadd.f32 0.0, %v207
    %209 = vmatmul.f32.gmra.mxu0 %v71
    %v210 = vpop.f32.mrf.mxu0
    %v211 = vadd.f32 0.0, %v210
    %212 = vmatmul.f32.gmra.mxu0 %v72
    %v213 = vpop.f32.mrf.mxu0
    %v214 = vadd.f32 0.0, %v213
    %215 = vmatmul.f32.gmra.mxu0 %v73
    %v216 = vpop.f32.mrf.mxu0
    %v217 = vadd.f32 0.0, %v216
    %218 = vmatmul.f32.gmra.mxu0 %v74
    %v219 = vpop.f32.mrf.mxu0
    %v220 = vadd.f32 0.0, %v219
    %221 = vmatmul.f32.gmra.mxu0 %v75
    %v222 = vpop.f32.mrf.mxu0
    %v223 = vadd.f32 0.0, %v222
    %224 = vmatmul.f32.gmra.mxu0 %v76
    %v225 = vpop.f32.mrf.mxu0
    %v226 = vadd.f32 0.0, %v225
    %227 = vmatmul.f32.gmra.mxu0 %v77
    %v228 = vpop.f32.mrf.mxu0
    %v229 = vadd.f32 0.0, %v228
    %230 = vmatmul.f32.gmra.mxu0 %v78
    %v231 = vpop.f32.mrf.mxu0
    %v232 = vadd.f32 0.0, %v231
    %233 = vmatmul.f32.gmra.mxu0 %v79
    %v234 = vpop.f32.mrf.mxu0
    %v235 = vadd.f32 0.0, %v234
    %236 = vmatmul.f32.gmra.mxu0 %v80
    %v237 = vpop.f32.mrf.mxu0
    %v238 = vadd.f32 0.0, %v237
    %239 = vmatmul.f32.gmra.mxu0 %v81
    %v240 = vpop.f32.mrf.mxu0
    %v241 = vadd.f32 0.0, %v240
    %242 = vmatmul.f32.gmra.mxu0 %v82
    %v243 = vpop.f32.mrf.mxu0
    %v244 = vadd.f32 0.0, %v243
    %245 = vmatmul.f32.gmra.mxu0 %v83
    %v246 = vpop.f32.mrf.mxu0
    %v247 = vadd.f32 0.0, %v246
    %248 = vmatmul.f32.gmra.mxu0 %v84
    %v249 = vpop.f32.mrf.mxu0
    %v250 = vadd.f32 0.0, %v249
    %251 = vmatmul.f32.gmra.mxu0 %v85
    %v252 = vpop.f32.mrf.mxu0
    %v253 = vadd.f32 0.0, %v252
    %254 = vmatmul.f32.gmra.mxu0 %v86
    %v255 = vpop.f32.mrf.mxu0
    %v256 = vadd.f32 0.0, %v255
    %257 = vmatmul.f32.gmra.mxu0 %v87
    %v258 = vpop.f32.mrf.mxu0
    %v259 = vadd.f32 0.0, %v258
    %260 = vmatmul.f32.gmra.mxu0 %v88
    %v261 = vpop.f32.mrf.mxu0
    %v262 = vadd.f32 0.0, %v261
    %263 = vmatmul.f32.gmra.mxu0 %v89
    %v264 = vpop.f32.mrf.mxu0
    %v265 = vadd.f32 0.0, %v264
    %266 = vmatmul.f32.gmra.mxu0 %v90
    %v267 = vpop.f32.mrf.mxu0
    %v268 = vadd.f32 0.0, %v267
    %269 = vmatmul.f32.gmra.mxu0 %v91
    %v270 = vpop.f32.mrf.mxu0
    %v271 = vadd.f32 0.0, %v270
    %272 = vmatmul.f32.gmra.mxu0 %v92
    %v273 = vpop.f32.mrf.mxu0
    %v274 = vadd.f32 0.0, %v273
    %275 = vmatmul.f32.gmra.mxu0 %v93
    %v276 = vpop.f32.mrf.mxu0
    %v277 = vadd.f32 0.0, %v276
    %278 = vmatmul.f32.gmra.mxu0 %v94
    %v279 = vpop.f32.mrf.mxu0
    %v280 = vadd.f32 0.0, %v279
    %281 = vmatmul.f32.gmra.mxu0 %v95
    %v282 = vpop.f32.mrf.mxu0
    %v283 = vadd.f32 0.0, %v282
    %284 = vmatmul.f32.gmra.mxu0 %v96
    %v285 = vpop.f32.mrf.mxu0
    %v286 = vadd.f32 0.0, %v285
    %287 = vmatmul.f32.gmra.mxu0 %v97
    %v288 = vpop.f32.mrf.mxu0
    %v289 = vadd.f32 0.0, %v288
    %290 = vmatmul.f32.gmra.mxu0 %v98
    %v291 = vpop.f32.mrf.mxu0
    %v292 = vadd.f32 0.0, %v291
    %293 = vmatmul.f32.gmra.mxu0 %v99
    %v294 = vpop.f32.mrf.mxu0
    %v295 = vadd.f32 0.0, %v294
    %296 = vmatmul.f32.gmra.mxu0 %v100
    %v297 = vpop.f32.mrf.mxu0
    %v298 = vadd.f32 0.0, %v297
    %299 = vmatmul.f32.gmra.mxu0 %v101
    %v300 = vpop.f32.mrf.mxu0
    %v301 = vadd.f32 0.0, %v300
    %302 = vmatmul.f32.gmra.mxu0 %v102
    %v303 = vpop.f32.mrf.mxu0
    %v304 = vadd.f32 0.0, %v303
    %305 = vmatmul.f32.gmra.mxu0 %v103
    %v306 = vpop.f32.mrf.mxu0
    %v307 = vadd.f32 0.0, %v306
    %308 = vmatmul.f32.gmra.mxu0 %v104
    %v309 = vpop.f32.mrf.mxu0
    %v310 = vadd.f32 0.0, %v309
    %311 = vmatmul.f32.gmra.mxu0 %v105
    %v312 = vpop.f32.mrf.mxu0
    %v313 = vadd.f32 0.0, %v312
    %314 = vmatmul.f32.gmra.mxu0 %v106
    %v315 = vpop.f32.mrf.mxu0
    %v316 = vadd.f32 0.0, %v315
    %317 = vmatmul.f32.gmra.mxu0 %v107
    %v318 = vpop.f32.mrf.mxu0
    %v319 = vadd.f32 0.0, %v318
    %320 = vmatmul.f32.gmra.mxu0 %v108
    %v321 = vpop.f32.mrf.mxu0
    %v322 = vadd.f32 0.0, %v321
    %323 = vmatmul.f32.gmra.mxu0 %v109
    %v324 = vpop.f32.mrf.mxu0
    %v325 = vadd.f32 0.0, %v324
    %326 = vmatmul.f32.gmra.mxu0 %v110
    %v327 = vpop.f32.mrf.mxu0
    %v328 = vadd.f32 0.0, %v327
    %329 = vmatmul.f32.gmra.mxu0 %v111
    %v330 = vpop.f32.mrf.mxu0
    %v331 = vadd.f32 0.0, %v330
    %332 = vmatmul.f32.gmra.mxu0 %v112
    %v333 = vpop.f32.mrf.mxu0
    %v334 = vadd.f32 0.0, %v333
    %335 = vmatmul.f32.gmra.mxu0 %v113
    %v336 = vpop.f32.mrf.mxu0
    %v337 = vadd.f32 0.0, %v336
    %338 = vdwg.mxu0
    %s339 = smul.u32 0, 512
    %s340 = scalar_lea.vmem [#allocation7], %s339
    %341 = vst [vmem:[%s340] sm:$0xff] %v148
    %342 = vst [vmem:[%s340 + $0x8] sm:$0xff] %v151
    %343 = vst [vmem:[%s340 + $0x10] sm:$0xff] %v154
    %344 = vst [vmem:[%s340 + $0x18] sm:$0xff] %v157
    %345 = vst [vmem:[%s340 + $0x20] sm:$0xff] %v160
    %346 = vst [vmem:[%s340 + $0x28] sm:$0xff] %v163
    %347 = vst [vmem:[%s340 + $0x30] sm:$0xff] %v166
    %348 = vst [vmem:[%s340 + $0x38] sm:$0xff] %v169
    %349 = vst [vmem:[%s340 + $0x40] sm:$0xff] %v172
    %350 = vst [vmem:[%s340 + $0x48] sm:$0xff] %v175
    %351 = vst [vmem:[%s340 + $0x50] sm:$0xff] %v178
    %352 = vst [vmem:[%s340 + $0x58] sm:$0xff] %v181
    %353 = vst [vmem:[%s340 + $0x60] sm:$0xff] %v184
    %354 = vst [vmem:[%s340 + $0x68] sm:$0xff] %v187
    %355 = vst [vmem:[%s340 + $0x70] sm:$0xff] %v190
    %356 = vst [vmem:[%s340 + $0x78] sm:$0xff] %v193
    %357 = vst [vmem:[%s340 + $0x80] sm:$0xff] %v196
    %358 = vst [vmem:[%s340 + $0x88] sm:$0xff] %v199
    %359 = vst [vmem:[%s340 + $0x90] sm:$0xff] %v202
    %360 = vst [vmem:[%s340 + $0x98] sm:$0xff] %v205
    %361 = vst [vmem:[%s340 + $0xa0] sm:$0xff] %v208
    %362 = vst [vmem:[%s340 + $0xa8] sm:$0xff] %v211
    %363 = vst [vmem:[%s340 + $0xb0] sm:$0xff] %v214
    %364 = vst [vmem:[%s340 + $0xb8] sm:$0xff] %v217
    %365 = vst [vmem:[%s340 + $0xc0] sm:$0xff] %v220
    %366 = vst [vmem:[%s340 + $0xc8] sm:$0xff] %v223
    %367 = vst [vmem:[%s340 + $0xd0] sm:$0xff] %v226
    %368 = vst [vmem:[%s340 + $0xd8] sm:$0xff] %v229
    %369 = vst [vmem:[%s340 + $0xe0] sm:$0xff] %v232
    %370 = vst [vmem:[%s340 + $0xe8] sm:$0xff] %v235
    %371 = vst [vmem:[%s340 + $0xf0] sm:$0xff] %v238
    %372 = vst [vmem:[%s340 + $0xf8] sm:$0xff] %v241
    %373 = vst [vmem:[%s340 + $0x100] sm:$0xff] %v244
    %374 = vst [vmem:[%s340 + $0x108] sm:$0xff] %v247
    %375 = vst [vmem:[%s340 + $0x110] sm:$0xff] %v250
    %376 = vst [vmem:[%s340 + $0x118] sm:$0xff] %v253
    %377 = vst [vmem:[%s340 + $0x120] sm:$0xff] %v256
    %378 = vst [vmem:[%s340 + $0x128] sm:$0xff] %v259
    %379 = vst [vmem:[%s340 + $0x130] sm:$0xff] %v262
    %380 = vst [vmem:[%s340 + $0x138] sm:$0xff] %v265
    %381 = vst [vmem:[%s340 + $0x140] sm:$0xff] %v268
    %382 = vst [vmem:[%s340 + $0x148] sm:$0xff] %v271
    %383 = vst [vmem:[%s340 + $0x150] sm:$0xff] %v274
    %384 = vst [vmem:[%s340 + $0x158] sm:$0xff] %v277
    %385 = vst [vmem:[%s340 + $0x160] sm:$0xff] %v280
    %386 = vst [vmem:[%s340 + $0x168] sm:$0xff] %v283
    %387 = vst [vmem:[%s340 + $0x170] sm:$0xff] %v286
    %388 = vst [vmem:[%s340 + $0x178] sm:$0xff] %v289
    %389 = vst [vmem:[%s340 + $0x180] sm:$0xff] %v292
    %390 = vst [vmem:[%s340 + $0x188] sm:$0xff] %v295
    %391 = vst [vmem:[%s340 + $0x190] sm:$0xff] %v298
    %392 = vst [vmem:[%s340 + $0x198] sm:$0xff] %v301
    %393 = vst [vmem:[%s340 + $0x1a0] sm:$0xff] %v304
    %394 = vst [vmem:[%s340 + $0x1a8] sm:$0xff] %v307
    %395 = vst [vmem:[%s340 + $0x1b0] sm:$0xff] %v310
    %396 = vst [vmem:[%s340 + $0x1b8] sm:$0xff] %v313
    %397 = vst [vmem:[%s340 + $0x1c0] sm:$0xff] %v316
    %398 = vst [vmem:[%s340 + $0x1c8] sm:$0xff] %v319
    %399 = vst [vmem:[%s340 + $0x1d0] sm:$0xff] %v322
    %400 = vst [vmem:[%s340 + $0x1d8] sm:$0xff] %v325
    %401 = vst [vmem:[%s340 + $0x1e0] sm:$0xff] %v328
    %402 = vst [vmem:[%s340 + $0x1e8] sm:$0xff] %v331
    %403 = vst [vmem:[%s340 + $0x1f0] sm:$0xff] %v334
    %404 = vst [vmem:[%s340 + $0x1f8] sm:$0xff] %v337
    %p405 = scmp.eq.s32.totalorder 0, 0
    // Predicated region
    $region26: #{tpu_custom_call.1} parent=1 // pred_check
      %p406 = pneg %p405
    $region27: #{tpu_custom_call.1} parent=1 // pred_check_branch
      %408 = sbr.rel (%p406) target = $region29
    $region28: #{tpu_custom_call.1} parent=1 // pred_region
      %v409 = vld [vmem:[#allocation7] sm:$0xff]
      %v410 = vld [vmem:[#allocation7 + $0x8] sm:$0xff]
      %v411 = vld [vmem:[#allocation7 + $0x10] sm:$0xff]
      %v412 = vld [vmem:[#allocation7 + $0x18] sm:$0xff]
      %v413 = vld [vmem:[#allocation7 + $0x20] sm:$0xff]
      %v414 = vld [vmem:[#allocation7 + $0x28] sm:$0xff]
      %v415 = vld [vmem:[#allocation7 + $0x30] sm:$0xff]
      %v416 = vld [vmem:[#allocation7 + $0x38] sm:$0xff]
      %v417 = vld [vmem:[#allocation7 + $0x40] sm:$0xff]
      %v418 = vld [vmem:[#allocation7 + $0x48] sm:$0xff]
      %v419 = vld [vmem:[#allocation7 + $0x50] sm:$0xff]
      %v420 = vld [vmem:[#allocation7 + $0x58] sm:$0xff]
      %v421 = vld [vmem:[#allocation7 + $0x60] sm:$0xff]
      %v422 = vld [vmem:[#allocation7 + $0x68] sm:$0xff]
      %v423 = vld [vmem:[#allocation7 + $0x70] sm:$0xff]
      %v424 = vld [vmem:[#allocation7 + $0x78] sm:$0xff]
      %v425 = vld [vmem:[#allocation7 + $0x80] sm:$0xff]
      %v426 = vld [vmem:[#allocation7 + $0x88] sm:$0xff]
      %v427 = vld [vmem:[#allocation7 + $0x90] sm:$0xff]
      %v428 = vld [vmem:[#allocation7 + $0x98] sm:$0xff]
      %v429 = vld [vmem:[#allocation7 + $0xa0] sm:$0xff]
      %v430 = vld [vmem:[#allocation7 + $0xa8] sm:$0xff]
      %v431 = vld [vmem:[#allocation7 + $0xb0] sm:$0xff]
      %v432 = vld [vmem:[#allocation7 + $0xb8] sm:$0xff]
      %v433 = vld [vmem:[#allocation7 + $0xc0] sm:$0xff]
      %v434 = vld [vmem:[#allocation7 + $0xc8] sm:$0xff]
      %v435 = vld [vmem:[#allocation7 + $0xd0] sm:$0xff]
      %v436 = vld [vmem:[#allocation7 + $0xd8] sm:$0xff]
      %v437 = vld [vmem:[#allocation7 + $0xe0] sm:$0xff]
      %v438 = vld [vmem:[#allocation7 + $0xe8] sm:$0xff]
      %v439 = vld [vmem:[#allocation7 + $0xf0] sm:$0xff]
      %v440 = vld [vmem:[#allocation7 + $0xf8] sm:$0xff]
      %v441 = vld [vmem:[#allocation7 + $0x100] sm:$0xff]
      %v442 = vld [vmem:[#allocation7 + $0x108] sm:$0xff]
      %v443 = vld [vmem:[#allocation7 + $0x110] sm:$0xff]
      %v444 = vld [vmem:[#allocation7 + $0x118] sm:$0xff]
      %v445 = vld [vmem:[#allocation7 + $0x120] sm:$0xff]
      %v446 = vld [vmem:[#allocation7 + $0x128] sm:$0xff]
      %v447 = vld [vmem:[#allocation7 + $0x130] sm:$0xff]
      %v448 = vld [vmem:[#allocation7 + $0x138] sm:$0xff]
      %v449 = vld [vmem:[#allocation7 + $0x140] sm:$0xff]
      %v450 = vld [vmem:[#allocation7 + $0x148] sm:$0xff]
      %v451 = vld [vmem:[#allocation7 + $0x150] sm:$0xff]
      %v452 = vld [vmem:[#allocation7 + $0x158] sm:$0xff]
      %v453 = vld [vmem:[#allocation7 + $0x160] sm:$0xff]
      %v454 = vld [vmem:[#allocation7 + $0x168] sm:$0xff]
      %v455 = vld [vmem:[#allocation7 + $0x170] sm:$0xff]
      %v456 = vld [vmem:[#allocation7 + $0x178] sm:$0xff]
      %v457 = vld [vmem:[#allocation7 + $0x180] sm:$0xff]
      %v458 = vld [vmem:[#allocation7 + $0x188] sm:$0xff]
      %v459 = vld [vmem:[#allocation7 + $0x190] sm:$0xff]
      %v460 = vld [vmem:[#allocation7 + $0x198] sm:$0xff]
      %v461 = vld [vmem:[#allocation7 + $0x1a0] sm:$0xff]
      %v462 = vld [vmem:[#allocation7 + $0x1a8] sm:$0xff]
      %v463 = vld [vmem:[#allocation7 + $0x1b0] sm:$0xff]
      %v464 = vld [vmem:[#allocation7 + $0x1b8] sm:$0xff]
      %v465 = vld [vmem:[#allocation7 + $0x1c0] sm:$0xff]
      %v466 = vld [vmem:[#allocation7 + $0x1c8] sm:$0xff]
      %v467 = vld [vmem:[#allocation7 + $0x1d0] sm:$0xff]
      %v468 = vld [vmem:[#allocation7 + $0x1d8] sm:$0xff]
      %v469 = vld [vmem:[#allocation7 + $0x1e0] sm:$0xff]
      %v470 = vld [vmem:[#allocation7 + $0x1e8] sm:$0xff]
      %v471 = vld [vmem:[#allocation7 + $0x1f0] sm:$0xff]
      %v472 = vld [vmem:[#allocation7 + $0x1f8] sm:$0xff]
      %473 = vmatpush.msra.mxu0 %v424
      %474 = vmatpush.msra.mxu0 %v423
      %475 = vmatpush.msra.mxu0 %v422
      %476 = vmatpush.msra.mxu0 %v421
      %477 = vmatpush.msra.mxu0 %v420
      %478 = vmatpush.msra.mxu0 %v419
      %479 = vmatpush.msra.mxu0 %v418
      %480 = vmatpush.msra.mxu0 %v417
      %481 = vmatpush.msra.mxu0 %v416
      %482 = vmatpush.msra.mxu0 %v415
      %483 = vmatpush.msra.mxu0 %v414
      %484 = vmatpush.msra.mxu0 %v413
      %485 = vmatpush.msra.mxu0 %v412
      %486 = vmatpush.msra.mxu0 %v411
      %487 = vmatpush.msra.mxu0 %v410
      %488 = vmatpush.msra.mxu0 %v409
      %489 = vmatmul.f32.gmra.mxu0 1.0
      %v490 = vpop.f32.mrf.mxu0
      %v491 = vadd.f32 0.0, %v490
      %492 = vdwg.mxu0
      %493 = vmatpush.msra.mxu0 %v440
      %494 = vmatpush.msra.mxu0 %v439
      %495 = vmatpush.msra.mxu0 %v438
      %496 = vmatpush.msra.mxu0 %v437
      %497 = vmatpush.msra.mxu0 %v436
      %498 = vmatpush.msra.mxu0 %v435
      %499 = vmatpush.msra.mxu0 %v434
      %500 = vmatpush.msra.mxu0 %v433
      %501 = vmatpush.msra.mxu0 %v432
      %502 = vmatpush.msra.mxu0 %v431
      %503 = vmatpush.msra.mxu0 %v430
      %504 = vmatpush.msra.mxu0 %v429
      %505 = vmatpush.msra.mxu0 %v428
      %506 = vmatpush.msra.mxu0 %v427
      %507 = vmatpush.msra.mxu0 %v426
      %508 = vmatpush.msra.mxu0 %v425
      %509 = vmatmul.f32.gmra.mxu0 1.0
      %v510 = vpop.f32.mrf.mxu0
      %v511 = vadd.f32 %v491, %v510
      %512 = vdwg.mxu0
      %513 = vmatpush.msra.mxu0 %v456
      %514 = vmatpush.msra.mxu0 %v455
      %515 = vmatpush.msra.mxu0 %v454
      %516 = vmatpush.msra.mxu0 %v453
      %517 = vmatpush.msra.mxu0 %v452
      %518 = vmatpush.msra.mxu0 %v451
      %519 = vmatpush.msra.mxu0 %v450
      %520 = vmatpush.msra.mxu0 %v449
      %521 = vmatpush.msra.mxu0 %v448
      %522 = vmatpush.msra.mxu0 %v447
      %523 = vmatpush.msra.mxu0 %v446
      %524 = vmatpush.msra.mxu0 %v445
      %525 = vmatpush.msra.mxu0 %v444
      %526 = vmatpush.msra.mxu0 %v443
      %527 = vmatpush.msra.mxu0 %v442
      %528 = vmatpush.msra.mxu0 %v441
      %529 = vmatmul.f32.gmra.mxu0 1.0
      %v530 = vpop.f32.mrf.mxu0
      %v531 = vadd.f32 %v511, %v530
      %532 = vdwg.mxu0
      %533 = vmatpush.msra.mxu0 %v472
      %534 = vmatpush.msra.mxu0 %v471
      %535 = vmatpush.msra.mxu0 %v470
      %536 = vmatpush.msra.mxu0 %v469
      %537 = vmatpush.msra.mxu0 %v468
      %538 = vmatpush.msra.mxu0 %v467
      %539 = vmatpush.msra.mxu0 %v466
      %540 = vmatpush.msra.mxu0 %v465
      %541 = vmatpush.msra.mxu0 %v464
      %542 = vmatpush.msra.mxu0 %v463
      %543 = vmatpush.msra.mxu0 %v462
      %544 = vmatpush.msra.mxu0 %v461
      %545 = vmatpush.msra.mxu0 %v460
      %546 = vmatpush.msra.mxu0 %v459
      %547 = vmatpush.msra.mxu0 %v458
      %548 = vmatpush.msra.mxu0 %v457
      %549 = vmatmul.f32.gmra.mxu0 1.0
      %v550 = vpop.f32.mrf.mxu0
      %v551 = vadd.f32 %v531, %v550
      %552 = vdwg.mxu0
      %v553 = vmul.f32 %v551, 0.001953125
      %v554 = vperm.slane %v553, 0
      %v555 = vsub.f32 %v409, %v554
      %v556 = vsub.f32 %v410, %v554
      %v557 = vsub.f32 %v411, %v554
      %v558 = vsub.f32 %v412, %v554
      %v559 = vsub.f32 %v413, %v554
      %v560 = vsub.f32 %v414, %v554
      %v561 = vsub.f32 %v415, %v554
      %v562 = vsub.f32 %v416, %v554
      %v563 = vsub.f32 %v417, %v554
      %v564 = vsub.f32 %v418, %v554
      %v565 = vsub.f32 %v419, %v554
      %v566 = vsub.f32 %v420, %v554
      %v567 = vsub.f32 %v421, %v554
      %v568 = vsub.f32 %v422, %v554
      %v569 = vsub.f32 %v423, %v554
      %v570 = vsub.f32 %v424, %v554
      %v571 = vsub.f32 %v425, %v554
      %v572 = vsub.f32 %v426, %v554
      %v573 = vsub.f32 %v427, %v554
      %v574 = vsub.f32 %v428, %v554
      %v575 = vsub.f32 %v429, %v554
      %v576 = vsub.f32 %v430, %v554
      %v577 = vsub.f32 %v431, %v554
      %v578 = vsub.f32 %v432, %v554
      %v579 = vsub.f32 %v433, %v554
      %v580 = vsub.f32 %v434, %v554
      %v581 = vsub.f32 %v435, %v554
      %v582 = vsub.f32 %v436, %v554
      %v583 = vsub.f32 %v437, %v554
      %v584 = vsub.f32 %v438, %v554
      %v585 = vsub.f32 %v439, %v554
      %v586 = vsub.f32 %v440, %v554
      %v587 = vsub.f32 %v441, %v554
      %v588 = vsub.f32 %v442, %v554
      %v589 = vsub.f32 %v443, %v554
      %v590 = vsub.f32 %v444, %v554
      %v591 = vsub.f32 %v445, %v554
      %v592 = vsub.f32 %v446, %v554
      %v593 = vsub.f32 %v447, %v554
      %v594 = vsub.f32 %v448, %v554
      %v595 = vsub.f32 %v449, %v554
      %v596 = vsub.f32 %v450, %v554
      %v597 = vsub.f32 %v451, %v554
      %v598 = vsub.f32 %v452, %v554
      %v599 = vsub.f32 %v453, %v554
      %v600 = vsub.f32 %v454, %v554
      %v601 = vsub.f32 %v455, %v554
      %v602 = vsub.f32 %v456, %v554
      %v603 = vsub.f32 %v457, %v554
      %v604 = vsub.f32 %v458, %v554
      %v605 = vsub.f32 %v459, %v554
      %v606 = vsub.f32 %v460, %v554
      %v607 = vsub.f32 %v461, %v554
      %v608 = vsub.f32 %v462, %v554
      %v609 = vsub.f32 %v463, %v554
      %v610 = vsub.f32 %v464, %v554
      %v611 = vsub.f32 %v465, %v554
      %v612 = vsub.f32 %v466, %v554
      %v613 = vsub.f32 %v467, %v554
      %v614 = vsub.f32 %v468, %v554
      %v615 = vsub.f32 %v469, %v554
      %v616 = vsub.f32 %v470, %v554
      %v617 = vsub.f32 %v471, %v554
      %v618 = vsub.f32 %v472, %v554
      %v619 = vmul.f32 %v555, %v555
      %v620 = vmul.f32 %v556, %v556
      %v621 = vmul.f32 %v557, %v557
      %v622 = vmul.f32 %v558, %v558
      %v623 = vmul.f32 %v559, %v559
      %v624 = vmul.f32 %v560, %v560
      %v625 = vmul.f32 %v561, %v561
      %v626 = vmul.f32 %v562, %v562
      %v627 = vmul.f32 %v563, %v563
      %v628 = vmul.f32 %v564, %v564
      %v629 = vmul.f32 %v565, %v565
      %v630 = vmul.f32 %v566, %v566
      %v631 = vmul.f32 %v567, %v567
      %v632 = vmul.f32 %v568, %v568
      %v633 = vmul.f32 %v569, %v569
      %v634 = vmul.f32 %v570, %v570
      %v635 = vmul.f32 %v571, %v571
      %v636 = vmul.f32 %v572, %v572
      %v637 = vmul.f32 %v573, %v573
      %v638 = vmul.f32 %v574, %v574
      %v639 = vmul.f32 %v575, %v575
      %v640 = vmul.f32 %v576, %v576
      %v641 = vmul.f32 %v577, %v577
      %v642 = vmul.f32 %v578, %v578
      %v643 = vmul.f32 %v579, %v579
      %v644 = vmul.f32 %v580, %v580
      %v645 = vmul.f32 %v581, %v581
      %v646 = vmul.f32 %v582, %v582
      %v647 = vmul.f32 %v583, %v583
      %v648 = vmul.f32 %v584, %v584
      %v649 = vmul.f32 %v585, %v585
      %v650 = vmul.f32 %v586, %v586
      %v651 = vmul.f32 %v587, %v587
      %v652 = vmul.f32 %v588, %v588
      %v653 = vmul.f32 %v589, %v589
      %v654 = vmul.f32 %v590, %v590
      %v655 = vmul.f32 %v591, %v591
      %v656 = vmul.f32 %v592, %v592
      %v657 = vmul.f32 %v593, %v593
      %v658 = vmul.f32 %v594, %v594
      %v659 = vmul.f32 %v595, %v595
      %v660 = vmul.f32 %v596, %v596
      %v661 = vmul.f32 %v597, %v597
      %v662 = vmul.f32 %v598, %v598
      %v663 = vmul.f32 %v599, %v599
      %v664 = vmul.f32 %v600, %v600
      %v665 = vmul.f32 %v601, %v601
      %v666 = vmul.f32 %v602, %v602
      %v667 = vmul.f32 %v603, %v603
      %v668 = vmul.f32 %v604, %v604
      %v669 = vmul.f32 %v605, %v605
      %v670 = vmul.f32 %v606, %v606
      %v671 = vmul.f32 %v607, %v607
      %v672 = vmul.f32 %v608, %v608
      %v673 = vmul.f32 %v609, %v609
      %v674 = vmul.f32 %v610, %v610
      %v675 = vmul.f32 %v611, %v611
      %v676 = vmul.f32 %v612, %v612
      %v677 = vmul.f32 %v613, %v613
      %v678 = vmul.f32 %v614, %v614
      %v679 = vmul.f32 %v615, %v615
      %v680 = vmul.f32 %v616, %v616
      %v681 = vmul.f32 %v617, %v617
      %v682 = vmul.f32 %v618, %v618
      %683 = vmatpush.msra.mxu0 %v634
      %684 = vmatpush.msra.mxu0 %v633
      %685 = vmatpush.msra.mxu0 %v632
      %686 = vmatpush.msra.mxu0 %v631
      %687 = vmatpush.msra.mxu0 %v630
      %688 = vmatpush.msra.mxu0 %v629
      %689 = vmatpush.msra.mxu0 %v628
      %690 = vmatpush.msra.mxu0 %v627
      %691 = vmatpush.msra.mxu0 %v626
      %692 = vmatpush.msra.mxu0 %v625
      %693 = vmatpush.msra.mxu0 %v624
      %694 = vmatpush.msra.mxu0 %v623
      %695 = vmatpush.msra.mxu0 %v622
      %696 = vmatpush.msra.mxu0 %v621
      %697 = vmatpush.msra.mxu0 %v620
      %698 = vmatpush.msra.mxu0 %v619
      %699 = vmatmul.f32.gmra.mxu0 1.0
      %v700 = vpop.f32.mrf.mxu0
      %v701 = vadd.f32 0.0, %v700
      %702 = vdwg.mxu0
      %703 = vmatpush.msra.mxu0 %v650
      %704 = vmatpush.msra.mxu0 %v649
      %705 = vmatpush.msra.mxu0 %v648
      %706 = vmatpush.msra.mxu0 %v647
      %707 = vmatpush.msra.mxu0 %v646
      %708 = vmatpush.msra.mxu0 %v645
      %709 = vmatpush.msra.mxu0 %v644
      %710 = vmatpush.msra.mxu0 %v643
      %711 = vmatpush.msra.mxu0 %v642
      %712 = vmatpush.msra.mxu0 %v641
      %713 = vmatpush.msra.mxu0 %v640
      %714 = vmatpush.msra.mxu0 %v639
      %715 = vmatpush.msra.mxu0 %v638
      %716 = vmatpush.msra.mxu0 %v637
      %717 = vmatpush.msra.mxu0 %v636
      %718 = vmatpush.msra.mxu0 %v635
      %719 = vmatmul.f32.gmra.mxu0 1.0
      %v720 = vpop.f32.mrf.mxu0
      %v721 = vadd.f32 %v701, %v720
      %722 = vdwg.mxu0
      %723 = vmatpush.msra.mxu0 %v666
      %724 = vmatpush.msra.mxu0 %v665
      %725 = vmatpush.msra.mxu0 %v664
      %726 = vmatpush.msra.mxu0 %v663
      %727 = vmatpush.msra.mxu0 %v662
      %728 = vmatpush.msra.mxu0 %v661
      %729 = vmatpush.msra.mxu0 %v660
      %730 = vmatpush.msra.mxu0 %v659
      %731 = vmatpush.msra.mxu0 %v658
      %732 = vmatpush.msra.mxu0 %v657
      %733 = vmatpush.msra.mxu0 %v656
      %734 = vmatpush.msra.mxu0 %v655
      %735 = vmatpush.msra.mxu0 %v654
      %736 = vmatpush.msra.mxu0 %v653
      %737 = vmatpush.msra.mxu0 %v652
      %738 = vmatpush.msra.mxu0 %v651
      %739 = vmatmul.f32.gmra.mxu0 1.0
      %v740 = vpop.f32.mrf.mxu0
      %v741 = vadd.f32 %v721, %v740
      %742 = vdwg.mxu0
      %743 = vmatpush.msra.mxu0 %v682
      %744 = vmatpush.msra.mxu0 %v681
      %745 = vmatpush.msra.mxu0 %v680
      %746 = vmatpush.msra.mxu0 %v679
      %747 = vmatpush.msra.mxu0 %v678
      %748 = vmatpush.msra.mxu0 %v677
      %749 = vmatpush.msra.mxu0 %v676
      %750 = vmatpush.msra.mxu0 %v675
      %751 = vmatpush.msra.mxu0 %v674
      %752 = vmatpush.msra.mxu0 %v673
      %753 = vmatpush.msra.mxu0 %v672
      %754 = vmatpush.msra.mxu0 %v671
      %755 = vmatpush.msra.mxu0 %v670
      %756 = vmatpush.msra.mxu0 %v669
      %757 = vmatpush.msra.mxu0 %v668
      %758 = vmatpush.msra.mxu0 %v667
      %759 = vmatmul.f32.gmra.mxu0 1.0
      %v760 = vpop.f32.mrf.mxu0
      %v761 = vadd.f32 %v741, %v760
      %762 = vdwg.mxu0
      %v763 = vmul.f32 %v761, 0.001953125
      %v764 = vld [vmem:[%s2] sm:$0x1]
      %v765 = vadd.f32 %v763, 1e-05
      %v766 = vrsqrt.pop %v765
      %v767 = vmul.f32 %v766, %v765
      %v768 = vmul.f32 %v767, %v766
      %v769 = vmul.f32 0.5, %v768
      %v770 = vsub.f32 1.5, %v769
      %v771 = vmul.f32 %v766, %v770
      %vm772 = vweird.f32 %v765
      %vm773 = vweird.f32 %v766
      %vm774 = vmor %vm772, %vm773
      %v775 = vsel %vm774, %v766, %v771
      %v776 = vmul.f32 %v764, %v775
      %v777 = vld [vmem:[%s3] sm:$0x1]
      %v778 = vmul.f32 %v553, %v776
      %v779 = vsub.f32 %v777, %v778
      %v781 = vperm.slane %v776, 0
      %v783 = vmul.f32 %v409, %v781
      %v784 = vmul.f32 %v410, %v781
      %v785 = vmul.f32 %v411, %v781
      %v786 = vmul.f32 %v412, %v781
      %v787 = vmul.f32 %v413, %v781
      %v788 = vmul.f32 %v414, %v781
      %v789 = vmul.f32 %v415, %v781
      %v790 = vmul.f32 %v416, %v781
      %v791 = vmul.f32 %v417, %v781
      %v792 = vmul.f32 %v418, %v781
      %v793 = vmul.f32 %v419, %v781
      %v794 = vmul.f32 %v420, %v781
      %v795 = vmul.f32 %v421, %v781
      %v796 = vmul.f32 %v422, %v781
      %v797 = vmul.f32 %v423, %v781
      %v798 = vmul.f32 %v424, %v781
      %v799 = vmul.f32 %v425, %v781
      %v800 = vmul.f32 %v426, %v781
      %v801 = vmul.f32 %v427, %v781
      %v802 = vmul.f32 %v428, %v781
      %v803 = vmul.f32 %v429, %v781
      %v804 = vmul.f32 %v430, %v781
      %v805 = vmul.f32 %v431, %v781
      %v806 = vmul.f32 %v432, %v781
      %v807 = vmul.f32 %v433, %v781
      %v808 = vmul.f32 %v434, %v781
      %v809 = vmul.f32 %v435, %v781
      %v810 = vmul.f32 %v436, %v781
      %v811 = vmul.f32 %v437, %v781
      %v812 = vmul.f32 %v438, %v781
      %v813 = vmul.f32 %v439, %v781
      %v814 = vmul.f32 %v440, %v781
      %v815 = vmul.f32 %v441, %v781
      %v816 = vmul.f32 %v442, %v781
      %v817 = vmul.f32 %v443, %v781
      %v818 = vmul.f32 %v444, %v781
      %v819 = vmul.f32 %v445, %v781
      %v820 = vmul.f32 %v446, %v781
      %v821 = vmul.f32 %v447, %v781
      %v822 = vmul.f32 %v448, %v781
      %v823 = vmul.f32 %v449, %v781
      %v824 = vmul.f32 %v450, %v781
      %v825 = vmul.f32 %v451, %v781
      %v826 = vmul.f32 %v452, %v781
      %v827 = vmul.f32 %v453, %v781
      %v828 = vmul.f32 %v454, %v781
      %v829 = vmul.f32 %v455, %v781
      %v830 = vmul.f32 %v456, %v781
      %v831 = vmul.f32 %v457, %v781
      %v832 = vmul.f32 %v458, %v781
      %v833 = vmul.f32 %v459, %v781
      %v834 = vmul.f32 %v460, %v781
      %v835 = vmul.f32 %v461, %v781
      %v836 = vmul.f32 %v462, %v781
      %v837 = vmul.f32 %v463, %v781
      %v838 = vmul.f32 %v464, %v781
      %v839 = vmul.f32 %v465, %v781
      %v840 = vmul.f32 %v466, %v781
      %v841 = vmul.f32 %v467, %v781
      %v842 = vmul.f32 %v468, %v781
      %v843 = vmul.f32 %v469, %v781
      %v844 = vmul.f32 %v470, %v781
      %v845 = vmul.f32 %v471, %v781
      %v846 = vmul.f32 %v472, %v781
      %v848 = vperm.slane %v779, 0
      %v850 = vadd.f32 %v783, %v848
      %v851 = vadd.f32 %v784, %v848
      %v852 = vadd.f32 %v785, %v848
      %v853 = vadd.f32 %v786, %v848
      %v854 = vadd.f32 %v787, %v848
      %v855 = vadd.f32 %v788, %v848
      %v856 = vadd.f32 %v789, %v848
      %v857 = vadd.f32 %v790, %v848
      %v858 = vadd.f32 %v791, %v848
      %v859 = vadd.f32 %v792, %v848
      %v860 = vadd.f32 %v793, %v848
      %v861 = vadd.f32 %v794, %v848
      %v862 = vadd.f32 %v795, %v848
      %v863 = vadd.f32 %v796, %v848
      %v864 = vadd.f32 %v797, %v848
      %v865 = vadd.f32 %v798, %v848
      %v866 = vadd.f32 %v799, %v848
      %v867 = vadd.f32 %v800, %v848
      %v868 = vadd.f32 %v801, %v848
      %v869 = vadd.f32 %v802, %v848
      %v870 = vadd.f32 %v803, %v848
      %v871 = vadd.f32 %v804, %v848
      %v872 = vadd.f32 %v805, %v848
      %v873 = vadd.f32 %v806, %v848
      %v874 = vadd.f32 %v807, %v848
      %v875 = vadd.f32 %v808, %v848
      %v876 = vadd.f32 %v809, %v848
      %v877 = vadd.f32 %v810, %v848
      %v878 = vadd.f32 %v811, %v848
      %v879 = vadd.f32 %v812, %v848
      %v880 = vadd.f32 %v813, %v848
      %v881 = vadd.f32 %v814, %v848
      %v882 = vadd.f32 %v815, %v848
      %v883 = vadd.f32 %v816, %v848
      %v884 = vadd.f32 %v817, %v848
      %v885 = vadd.f32 %v818, %v848
      %v886 = vadd.f32 %v819, %v848
      %v887 = vadd.f32 %v820, %v848
      %v888 = vadd.f32 %v821, %v848
      %v889 = vadd.f32 %v822, %v848
      %v890 = vadd.f32 %v823, %v848
      %v891 = vadd.f32 %v824, %v848
      %v892 = vadd.f32 %v825, %v848
      %v893 = vadd.f32 %v826, %v848
      %v894 = vadd.f32 %v827, %v848
      %v895 = vadd.f32 %v828, %v848
      %v896 = vadd.f32 %v829, %v848
      %v897 = vadd.f32 %v830, %v848
      %v898 = vadd.f32 %v831, %v848
      %v899 = vadd.f32 %v832, %v848
      %v900 = vadd.f32 %v833, %v848
      %v901 = vadd.f32 %v834, %v848
      %v902 = vadd.f32 %v835, %v848
      %v903 = vadd.f32 %v836, %v848
      %v904 = vadd.f32 %v837, %v848
      %v905 = vadd.f32 %v838, %v848
      %v906 = vadd.f32 %v839, %v848
      %v907 = vadd.f32 %v840, %v848
      %v908 = vadd.f32 %v841, %v848
      %v909 = vadd.f32 %v842, %v848
      %v910 = vadd.f32 %v843, %v848
      %v911 = vadd.f32 %v844, %v848
      %v912 = vadd.f32 %v845, %v848
      %v913 = vadd.f32 %v846, %v848
      %v914 = vmax.f32 %v850, 0.0
      %v915 = vmax.f32 %v851, 0.0
      %v916 = vmax.f32 %v852, 0.0
      %v917 = vmax.f32 %v853, 0.0
      %v918 = vmax.f32 %v854, 0.0
      %v919 = vmax.f32 %v855, 0.0
      %v920 = vmax.f32 %v856, 0.0
      %v921 = vmax.f32 %v857, 0.0
      %v922 = vmax.f32 %v858, 0.0
      %v923 = vmax.f32 %v859, 0.0
      %v924 = vmax.f32 %v860, 0.0
      %v925 = vmax.f32 %v861, 0.0
      %v926 = vmax.f32 %v862, 0.0
      %v927 = vmax.f32 %v863, 0.0
      %v928 = vmax.f32 %v864, 0.0
      %v929 = vmax.f32 %v865, 0.0
      %v930 = vmax.f32 %v866, 0.0
      %v931 = vmax.f32 %v867, 0.0
      %v932 = vmax.f32 %v868, 0.0
      %v933 = vmax.f32 %v869, 0.0
      %v934 = vmax.f32 %v870, 0.0
      %v935 = vmax.f32 %v871, 0.0
      %v936 = vmax.f32 %v872, 0.0
      %v937 = vmax.f32 %v873, 0.0
      %v938 = vmax.f32 %v874, 0.0
      %v939 = vmax.f32 %v875, 0.0
      %v940 = vmax.f32 %v876, 0.0
      %v941 = vmax.f32 %v877, 0.0
      %v942 = vmax.f32 %v878, 0.0
      %v943 = vmax.f32 %v879, 0.0
      %v944 = vmax.f32 %v880, 0.0
      %v945 = vmax.f32 %v881, 0.0
      %v946 = vmax.f32 %v882, 0.0
      %v947 = vmax.f32 %v883, 0.0
      %v948 = vmax.f32 %v884, 0.0
      %v949 = vmax.f32 %v885, 0.0
      %v950 = vmax.f32 %v886, 0.0
      %v951 = vmax.f32 %v887, 0.0
      %v952 = vmax.f32 %v888, 0.0
      %v953 = vmax.f32 %v889, 0.0
      %v954 = vmax.f32 %v890, 0.0
      %v955 = vmax.f32 %v891, 0.0
      %v956 = vmax.f32 %v892, 0.0
      %v957 = vmax.f32 %v893, 0.0
      %v958 = vmax.f32 %v894, 0.0
      %v959 = vmax.f32 %v895, 0.0
      %v960 = vmax.f32 %v896, 0.0
      %v961 = vmax.f32 %v897, 0.0
      %v962 = vmax.f32 %v898, 0.0
      %v963 = vmax.f32 %v899, 0.0
      %v964 = vmax.f32 %v900, 0.0
      %v965 = vmax.f32 %v901, 0.0
      %v966 = vmax.f32 %v902, 0.0
      %v967 = vmax.f32 %v903, 0.0
      %v968 = vmax.f32 %v904, 0.0
      %v969 = vmax.f32 %v905, 0.0
      %v970 = vmax.f32 %v906, 0.0
      %v971 = vmax.f32 %v907, 0.0
      %v972 = vmax.f32 %v908, 0.0
      %v973 = vmax.f32 %v909, 0.0
      %v974 = vmax.f32 %v910, 0.0
      %v975 = vmax.f32 %v911, 0.0
      %v976 = vmax.f32 %v912, 0.0
      %v977 = vmax.f32 %v913, 0.0
      %978 = vst [vmem:[#allocation7] sm:$0xff] %v914
      %979 = vst [vmem:[#allocation7 + $0x8] sm:$0xff] %v915
      %980 = vst [vmem:[#allocation7 + $0x10] sm:$0xff] %v916
      %981 = vst [vmem:[#allocation7 + $0x18] sm:$0xff] %v917
      %982 = vst [vmem:[#allocation7 + $0x20] sm:$0xff] %v918
      %983 = vst [vmem:[#allocation7 + $0x28] sm:$0xff] %v919
      %984 = vst [vmem:[#allocation7 + $0x30] sm:$0xff] %v920
      %985 = vst [vmem:[#allocation7 + $0x38] sm:$0xff] %v921
      %986 = vst [vmem:[#allocation7 + $0x40] sm:$0xff] %v922
      %987 = vst [vmem:[#allocation7 + $0x48] sm:$0xff] %v923
      %988 = vst [vmem:[#allocation7 + $0x50] sm:$0xff] %v924
      %989 = vst [vmem:[#allocation7 + $0x58] sm:$0xff] %v925
      %990 = vst [vmem:[#allocation7 + $0x60] sm:$0xff] %v926
      %991 = vst [vmem:[#allocation7 + $0x68] sm:$0xff] %v927
      %992 = vst [vmem:[#allocation7 + $0x70] sm:$0xff] %v928
      %993 = vst [vmem:[#allocation7 + $0x78] sm:$0xff] %v929
      %994 = vst [vmem:[#allocation7 + $0x80] sm:$0xff] %v930
      %995 = vst [vmem:[#allocation7 + $0x88] sm:$0xff] %v931
      %996 = vst [vmem:[#allocation7 + $0x90] sm:$0xff] %v932
      %997 = vst [vmem:[#allocation7 + $0x98] sm:$0xff] %v933
      %998 = vst [vmem:[#allocation7 + $0xa0] sm:$0xff] %v934
      %999 = vst [vmem:[#allocation7 + $0xa8] sm:$0xff] %v935
      %1000 = vst [vmem:[#allocation7 + $0xb0] sm:$0xff] %v936
      %1001 = vst [vmem:[#allocation7 + $0xb8] sm:$0xff] %v937
      %1002 = vst [vmem:[#allocation7 + $0xc0] sm:$0xff] %v938
      %1003 = vst [vmem:[#allocation7 + $0xc8] sm:$0xff] %v939
      %1004 = vst [vmem:[#allocation7 + $0xd0] sm:$0xff] %v940
      %1005 = vst [vmem:[#allocation7 + $0xd8] sm:$0xff] %v941
      %1006 = vst [vmem:[#allocation7 + $0xe0] sm:$0xff] %v942
      %1007 = vst [vmem:[#allocation7 + $0xe8] sm:$0xff] %v943
      %1008 = vst [vmem:[#allocation7 + $0xf0] sm:$0xff] %v944
      %1009 = vst [vmem:[#allocation7 + $0xf8] sm:$0xff] %v945
      %1010 = vst [vmem:[#allocation7 + $0x100] sm:$0xff] %v946
      %1011 = vst [vmem:[#allocation7 + $0x108] sm:$0xff] %v947
      %1012 = vst [vmem:[#allocation7 + $0x110] sm:$0xff] %v948
      %1013 = vst [vmem:[#allocation7 + $0x118] sm:$0xff] %v949
      %1014 = vst [vmem:[#allocation7 + $0x120] sm:$0xff] %v950
      %1015 = vst [vmem:[#allocation7 + $0x128] sm:$0xff] %v951
      %1016 = vst [vmem:[#allocation7 + $0x130] sm:$0xff] %v952
      %1017 = vst [vmem:[#allocation7 + $0x138] sm:$0xff] %v953
      %1018 = vst [vmem:[#allocation7 + $0x140] sm:$0xff] %v954
      %1019 = vst [vmem:[#allocation7 + $0x148] sm:$0xff] %v955
      %1020 = vst [vmem:[#allocation7 + $0x150] sm:$0xff] %v956
      %1021 = vst [vmem:[#allocation7 + $0x158] sm:$0xff] %v957
      %1022 = vst [vmem:[#allocation7 + $0x160] sm:$0xff] %v958
      %1023 = vst [vmem:[#allocation7 + $0x168] sm:$0xff] %v959
      %1024 = vst [vmem:[#allocation7 + $0x170] sm:$0xff] %v960
      %1025 = vst [vmem:[#allocation7 + $0x178] sm:$0xff] %v961
      %1026 = vst [vmem:[#allocation7 + $0x180] sm:$0xff] %v962
      %1027 = vst [vmem:[#allocation7 + $0x188] sm:$0xff] %v963
      %1028 = vst [vmem:[#allocation7 + $0x190] sm:$0xff] %v964
      %1029 = vst [vmem:[#allocation7 + $0x198] sm:$0xff] %v965
      %1030 = vst [vmem:[#allocation7 + $0x1a0] sm:$0xff] %v966
      %1031 = vst [vmem:[#allocation7 + $0x1a8] sm:$0xff] %v967
      %1032 = vst [vmem:[#allocation7 + $0x1b0] sm:$0xff] %v968
      %1033 = vst [vmem:[#allocation7 + $0x1b8] sm:$0xff] %v969
      %1034 = vst [vmem:[#allocation7 + $0x1c0] sm:$0xff] %v970
      %1035 = vst [vmem:[#allocation7 + $0x1c8] sm:$0xff] %v971
      %1036 = vst [vmem:[#allocation7 + $0x1d0] sm:$0xff] %v972
      %1037 = vst [vmem:[#allocation7 + $0x1d8] sm:$0xff] %v973
      %1038 = vst [vmem:[#allocation7 + $0x1e0] sm:$0xff] %v974
      %1039 = vst [vmem:[#allocation7 + $0x1e8] sm:$0xff] %v975
      %1040 = vst [vmem:[#allocation7 + $0x1f0] sm:$0xff] %v976
      %1041 = vst [vmem:[#allocation7 + $0x1f8] sm:$0xff] %v977
    $region29: #{tpu_custom_call.1} parent=1 // pred_fallthru
      _
    // Predicated region
    $region30: #{tpu_custom_call.1} parent=1 // pred_check
      _
    $region31: #{tpu_custom_call.1} parent=1 // pred_check_branch
      %1043 = sbr.rel (0) target = $region33
    $region32: #{tpu_custom_call.1} parent=1 // pred_region
      %1045 = vsyncadd [#allocation4], 0
      %s1046 = sshll.u32 [#allocation7], 4
      %s1047 = int_to_ptr.vmem [resolvable:$true] %s1046
      %s1048 = sshll.u32 %s4, 4
      %s1049 = int_to_ptr.hbm [resolvable:$true] %s1048
      %1054 = dma.vmem_to_hbm [thread:$0]  %s1047, 8192, %s1049, [#allocation4], 128, 128, 8
    $region33: #{tpu_custom_call.1} parent=1 // pred_fallthru
      _
    // Predicated region
    $region34: #{tpu_custom_call.1} parent=1 // pred_check
      _
    $region35: #{tpu_custom_call.1} parent=1 // pred_check_branch
      %1056 = sbr.rel (0) target = $region37
    $region36: #{tpu_custom_call.1} parent=1 // pred_region
      %1058 = dma.done [#allocation4], 8192
    $region37: #{tpu_custom_call.1} parent=1 // pred_fallthru
      _
    %1059 = vsyncpa [#allocation3], 1
    %1060 = vsyncpa [#allocation6], 1
    %1061 = vsyncpa [#allocation4], 1

</llo_original>
